<compile_context>
chip_gen: v5e
topology: v5e:2x2
jax: 0.10.0
libtpu: 0.0.40
codegen_flags: <defaults>
</compile_context>

<pallas_src>
import functools
import math

import jax
import jax.numpy as jnp
import numpy as np
from jax import lax
from jax.experimental import pallas as pl
from jax.experimental.pallas import tpu as pltpu

EPS = 1e-5
LANES = 128          # lane-dense channel padding


# ----------------------------------------------------------------------------- helpers
def _interp_coeffs(out_size, in_size):
    """(lo, hi, frac) per output index for align_corners=True bilinear."""
    coeffs = []
    for i in range(out_size):
        src = 0.0 if out_size == 1 else i * (in_size - 1) / (out_size - 1)
        lo = min(int(math.floor(src)), in_size - 1)
        hi = min(lo + 1, in_size - 1)
        coeffs.append((lo, hi, float(src - lo)))
    return coeffs


def _interp_matrix(out_size, in_size):
    a = np.zeros((out_size, in_size), np.float32)
    for i, (lo, hi, f) in enumerate(_interp_coeffs(out_size, in_size)):
        a[i, lo] += 1.0 - f
        a[i, hi] += f
    return a


def _bn_affine(stats, gamma, beta, count):
    """Fold one-pass batch stats into per-channel scale/shift (tiny XLA glue)."""
    s = jnp.sum(stats, axis=(0, 1))                      # (2, LANES)
    mean = s[0] / count
    var = jnp.maximum(s[1] / count - mean * mean, 0.0)
    scale = gamma * lax.rsqrt(var + EPS)
    shift = beta - mean * scale
    return jnp.stack([scale, shift], axis=0)             # (2, LANES)


# ----------------------------------------------------------------------------- kernels
def _upsample_w_kernel(aw_ref, x1t_ref, out_ref):
    # W-direction bilinear interp as an MXU matmul.
    # aw: (Wp, w)   x1t: (1, w, h*LANES)   out: (1, Wp, h*LANES)
    out_ref[0] = jnp.dot(aw_ref[...], x1t_ref[0], preferred_element_type=jnp.float32)


def _upsample_h_concat_kernel(ah_ref, x1w_ref, x2_ref, out_ref):
    # H-direction interp (halo + conv zero-pad folded into zero rows of ah) and
    # channel "concat" (disjoint-lane add with the pre-padded skip tile).
    # ah: (1, THb, h)   x1w: (1, h, Wp*LANES)   x2/out: (1, 1, THb, Wp*LANES)
    up = jnp.dot(ah_ref[0], x1w_ref[0], preferred_element_type=jnp.float32)
    out_ref[0, 0] = up + x2_ref[0, 0]


def _conv_taps(xflat, w_ref, rows_out, wp):
    """3x3 conv as 9 shifted row-slices of one flattened (rows, LANES) buffer.

    xflat row b*wp+u holds input image row (b-offset), padded col u.  Tap (dy, dx)
    of output flat row m = r*wp+u is xflat[m + (dy+1)*wp + dx - 1]; the two padding
    columns of every row compute garbage that is ignored downstream.
    """
    mo = rows_out * wp
    acc = jnp.zeros((mo, w_ref.shape[-1]), jnp.float32)
    for dy in range(3):
        for dx in range(3):
            off = (dy + 1) * wp + dx - 1
            acc = acc + jnp.dot(xflat[off:off + mo, :], w_ref[dy * 3 + dx],
                                preferred_element_type=jnp.float32)
    return acc


def _conv1_kernel(tile_h, width, xin_ref, w1_ref, acc_ref, stats_ref):
    # xin: (1, 1, tile_h+6, Wp, LANES) concatenated & padded input tile
    # acc: (1, 1, tile_h+2, Wp, LANES) pre-BN conv1 output (1 halo row each side)
    wp = width + 2
    rows_out = tile_h + 2
    xflat = xin_ref[0, 0].reshape((tile_h + 6) * wp, LANES)
    acc = _conv_taps(xflat, w1_ref, rows_out, wp)
    acc3 = acc.reshape(rows_out, wp, LANES)
    acc_ref[0, 0] = acc3
    # partial BN1 stats over this tile's *owned* region only (no double counting)
    owned = acc3[1:tile_h + 1, 1:width + 1, :].reshape(tile_h * width, LANES)
    stats_ref[0, 0, 0:1, :] = jnp.sum(owned, axis=0, keepdims=True)
    stats_ref[0, 0, 1:2, :] = jnp.sum(owned * owned, axis=0, keepdims=True)


def _conv2_kernel(tile_h, width, height, acc1_ref, aff_ref, w2_ref, acc_ref, stats_ref):
    wp = width + 2
    t = pl.program_id(1)

    a1 = acc1_ref[0, 0]                                   # (tile_h+2, Wp, LANES)
    scale = aff_ref[0:1, :].reshape(1, 1, LANES)
    shift = aff_ref[1:2, :].reshape(1, 1, LANES)
    y = jnp.maximum(a1 * scale + shift, 0.0)              # BN1 + ReLU

    # conv zero-padding must be zero *after* BN+ReLU -> mask out-of-image rows
    # and the two padding columns (also kills the garbage columns of acc1).
    rows = lax.broadcasted_iota(jnp.int32, y.shape, 0) + (t * tile_h - 1)
    cols = lax.broadcasted_iota(jnp.int32, y.shape, 1)
    valid = (rows >= 0) & (rows < height) & (cols >= 1) & (cols <= width)
    y = jnp.where(valid, y, 0.0)

    zrow = jnp.zeros((1, wp, LANES), jnp.float32)
    ybuf = jnp.concatenate([zrow, y, zrow], axis=0)       # (tile_h+4, Wp, LANES)
    yflat = ybuf.reshape((tile_h + 4) * wp, LANES)

    acc = _conv_taps(yflat, w2_ref, tile_h, wp)
    acc3 = acc.reshape(tile_h, wp, LANES)
    acc_ref[0, 0] = acc3
    owned = acc3[:, 1:width + 1, :].reshape(tile_h * width, LANES)
    stats_ref[0, 0, 0:1, :] = jnp.sum(owned, axis=0, keepdims=True)
    stats_ref[0, 0, 1:2, :] = jnp.sum(owned * owned, axis=0, keepdims=True)


def _bn_relu_kernel(acc_ref, aff_ref, out_ref):
    a = acc_ref[0, 0]
    scale = aff_ref[0:1, :].reshape(1, 1, LANES)
    shift = aff_ref[1:2, :].reshape(1, 1, LANES)
    out_ref[0, 0] = jnp.maximum(a * scale + shift, 0.0)


# ----------------------------------------------------------------------------- wrapper
def up_forward(x1_nchw, x2_nchw, params, tile_h=8):
    """Forward of `up(in_ch, out_ch, bilinear=True)`; NCHW in, NCHW out."""
    x1 = jnp.transpose(x1_nchw, (0, 2, 3, 1)).astype(jnp.float32)    # (N, h, w, C1)
    x2 = jnp.transpose(x2_nchw, (0, 2, 3, 1)).astype(jnp.float32)    # (N, H2, W2, C2)
    n, h, w, c1 = x1.shape
    H, W = 2 * h, 2 * w
    c2 = x2.shape[-1]

    # torch-style F.pad(x2, ...) with the original module's diffX/diffY index swap
    diffX = H - x2.shape[1]
    diffY = W - x2.shape[2]
    assert diffX >= 0 and diffY >= 0, "crop not supported"
    x2 = jnp.pad(x2, ((0, 0), (diffY // 2, diffY // 2), (diffX // 2, diffX // 2), (0, 0)))
    assert x2.shape[1] == H and x2.shape[2] == W, "spatial mismatch after pad"

    cin = c1 + c2
    cout = params["w1"].shape[-1]
    assert cin <= LANES and cout <= LANES  # TODO(synk): tile channels for >128
    cp = LANES
    wp = W + 2

    th = tile_h if H % tile_h == 0 else H       # row-tile height
    t_tiles = H // th
    thb = th + 6                                # input tile rows (3-row halo each side)

    # lane-dense channel packing: x2 -> lanes [0,c2), x1 -> lanes [c2, c2+c1)
    x2p = jnp.pad(x2, ((0, 0), (0, 0), (0, 0), (0, cp - c2)))
    x1p = jnp.pad(x1, ((0, 0), (0, 0), (0, 0), (c2, cp - c2 - c1)))

    # static interpolation matrices; conv zero-pad / halo rows folded in as zeros
    a_w = np.zeros((wp, w), np.float32)
    a_w[1:W + 1, :] = _interp_matrix(W, w)
    a_h_full = np.zeros((H + 6, h), np.float32)
    a_h_full[3:H + 3, :] = _interp_matrix(H, h)
    a_h_tiles = jnp.asarray(
        np.stack([a_h_full[t * th: t * th + thb] for t in range(t_tiles)]))
    a_w = jnp.asarray(a_w)

    # packed conv weights (9, cp, cp); conv biases dropped (absorbed by training BN)
    def pack_w(wgt, ci, co):
        wr = jnp.reshape(wgt.astype(jnp.float32), (9, ci, co))
        return jnp.zeros((9, cp, cp), jnp.float32).at[:, :ci, :co].set(wr)

    def pad_vec(v):
        return jnp.zeros((cp,), jnp.float32).at[:cout].set(v.astype(jnp.float32))

    w1p, w2p = pack_w(params["w1"], cin, cout), pack_w(params["w2"], cout, cout)
    g1, be1 = pad_vec(params["g1"]), pad_vec(params["be1"])
    g2, be2 = pad_vec(params["g2"]), pad_vec(params["be2"])

    cp1 = pltpu.CompilerParams(dimension_semantics=("parallel",),
                               vmem_limit_bytes=32 * 1024 * 1024)
    cp2 = pltpu.CompilerParams(dimension_semantics=("parallel", "parallel"),
                               vmem_limit_bytes=32 * 1024 * 1024)

    # ---- stage 1a: W-direction bilinear interp (MXU matmul)
    x1t = jnp.transpose(x1p, (0, 2, 1, 3)).reshape(n, w, h * cp)
    x1w_raw = pl.pallas_call(
        _upsample_w_kernel,
        grid=(n,),
        in_specs=[pl.BlockSpec((wp, w), lambda i: (0, 0)),
                  pl.BlockSpec((1, w, h * cp), lambda i: (i, 0, 0))],
        out_specs=pl.BlockSpec((1, wp, h * cp), lambda i: (i, 0, 0)),
        out_shape=jax.ShapeDtypeStruct((n, wp, h * cp), jnp.float32),
        compiler_params=cp1,
    )(a_w, x1t)
    # layout plumbing only: move W onto the lane-group axis for the H-interp matmul
    x1w = jnp.transpose(x1w_raw.reshape(n, wp, h, cp), (0, 2, 1, 3)).reshape(n, h, wp * cp)

    # overlapping (halo'd) row tiles of the spatially pre-padded skip input
    x2_buf = jnp.pad(x2p, ((0, 0), (3, 3), (1, 1), (0, 0)))          # (N, H+6, Wp, cp)
    x2_tiles = jnp.stack([x2_buf[:, t * th: t * th + thb] for t in range(t_tiles)],
                         axis=1).reshape(n, t_tiles, thb, wp * cp)

    # ---- stage 1b: H-direction interp (MXU matmul) + channel concat (disjoint lanes)
    xin_flat = pl.pallas_call(
        _upsample_h_concat_kernel,
        grid=(n, t_tiles),
        in_specs=[pl.BlockSpec((1, thb, h), lambda i, j: (j, 0, 0)),
                  pl.BlockSpec((1, h, wp * cp), lambda i, j: (i, 0, 0)),
                  pl.BlockSpec((1, 1, thb, wp * cp), lambda i, j: (i, j, 0, 0))],
        out_specs=pl.BlockSpec((1, 1, thb, wp * cp), lambda i, j: (i, j, 0, 0)),
        out_shape=jax.ShapeDtypeStruct((n, t_tiles, thb, wp * cp), jnp.float32),
        compiler_params=cp2,
    )(a_h_tiles, x1w, x2_tiles)
    xin_tiles = xin_flat.reshape(n, t_tiles, thb, wp, cp)            # free view change

    # ---- stage 2: conv1 (9 lane-dense MXU taps) + per-tile BN1 partial stats
    acc1_tiles, stats1 = pl.pallas_call(
        functools.partial(_conv1_kernel, th, W),
        grid=(n, t_tiles),
        in_specs=[pl.BlockSpec((1, 1, thb, wp, cp), lambda i, j: (i, j, 0, 0, 0)),
                  pl.BlockSpec((9, cp, cp), lambda i, j: (0, 0, 0))],
        out_specs=[pl.BlockSpec((1, 1, th + 2, wp, cp), lambda i, j: (i, j, 0, 0, 0)),
                   pl.BlockSpec((1, 1, 2, cp), lambda i, j: (i, j, 0, 0))],
        out_shape=(jax.ShapeDtypeStruct((n, t_tiles, th + 2, wp, cp), jnp.float32),
                   jax.ShapeDtypeStruct((n, t_tiles, 2, cp), jnp.float32)),
        compiler_params=cp2,
    )(xin_tiles, w1p)

    count = float(n * H * W)
    aff1 = _bn_affine(stats1, g1, be1, count)

    # ---- stage 3: BN1+ReLU (masked to conv zero-pad), conv2, BN2 partial stats
    acc2_tiles, stats2 = pl.pallas_call(
        functools.partial(_conv2_kernel, th, W, H),
        grid=(n, t_tiles),
        in_specs=[pl.BlockSpec((1, 1, th + 2, wp, cp), lambda i, j: (i, j, 0, 0, 0)),
                  pl.BlockSpec((2, cp), lambda i, j: (0, 0)),
                  pl.BlockSpec((9, cp, cp), lambda i, j: (0, 0, 0))],
        out_specs=[pl.BlockSpec((1, 1, th, wp, cp), lambda i, j: (i, j, 0, 0, 0)),
                   pl.BlockSpec((1, 1, 2, cp), lambda i, j: (i, j, 0, 0))],
        out_shape=(jax.ShapeDtypeStruct((n, t_tiles, th, wp, cp), jnp.float32),
                   jax.ShapeDtypeStruct((n, t_tiles, 2, cp), jnp.float32)),
        compiler_params=cp2,
    )(acc1_tiles, aff1, w2p)

    aff2 = _bn_affine(stats2, g2, be2, count)

    # ---- stage 4: BN2 + ReLU (elementwise, lane-dense)
    y2_tiles = pl.pallas_call(
        _bn_relu_kernel,
        grid=(n, t_tiles),
        in_specs=[pl.BlockSpec((1, 1, th, wp, cp), lambda i, j: (i, j, 0, 0, 0)),
                  pl.BlockSpec((2, cp), lambda i, j: (0, 0))],
        out_specs=pl.BlockSpec((1, 1, th, wp, cp), lambda i, j: (i, j, 0, 0, 0)),
        out_shape=jax.ShapeDtypeStruct((n, t_tiles, th, wp, cp), jnp.float32),
        compiler_params=cp2,
    )(acc2_tiles, aff2)

    out = y2_tiles[:, :, :, 1:W + 1, :cout].reshape(n, H, W, cout)   # drop pad lanes/cols
    return jnp.transpose(out, (0, 3, 1, 2))                          # back to NCHW


# ----------------------------------------------------------------------------- reference
def up_reference(x1_nchw, x2_nchw, params):
    """Pure JAX/XLA reference of the PyTorch module (training-mode BN, with biases)."""
    x1 = jnp.transpose(x1_nchw, (0, 2, 3, 1)).astype(jnp.float32)
    x2 = jnp.transpose(x2_nchw, (0, 2, 3, 1)).astype(jnp.float32)
    n, h, w, _ = x1.shape
    H, W = 2 * h, 2 * w
    ah = jnp.asarray(_interp_matrix(H, h))
    aw = jnp.asarray(_interp_matrix(W, w))
    x1u = jnp.einsum("Ph,nhwc->nPwc", ah, x1)
    x1u = jnp.einsum("Qw,nPwc->nPQc", aw, x1u)
    diffX = H - x2.shape[1]
    diffY = W - x2.shape[2]
    x2 = jnp.pad(x2, ((0, 0), (diffY // 2, diffY // 2), (diffX // 2, diffX // 2), (0, 0)))
    x = jnp.concatenate([x2, x1u], axis=-1)

    def conv_bn_relu(v, wgt, b, g, be):
        y = lax.conv_general_dilated(v, wgt.astype(jnp.float32), (1, 1), ((1, 1), (1, 1)),
                                     dimension_numbers=("NHWC", "HWIO", "NHWC"),
                                     precision=lax.Precision.HIGHEST) + b
        mean = jnp.mean(y, axis=(0, 1, 2))
        var = jnp.mean((y - mean) ** 2, axis=(0, 1, 2))
        return jnp.maximum((y - mean) * lax.rsqrt(var + EPS) * g + be, 0.0)

    y = conv_bn_relu(x, params["w1"], params["b1"], params["g1"], params["be1"])
    y = conv_bn_relu(y, params["w2"], params["b2"], params["g2"], params["be2"])
    return jnp.transpose(y, (0, 3, 1, 2))


def make_params(key, in_ch, out_ch):
    ks = jax.random.split(key, 8)
    return {
        "w1": 0.1 * jax.random.normal(ks[0], (3, 3, in_ch, out_ch), jnp.float32),
        "b1": 0.1 * jax.random.normal(ks[1], (out_ch,), jnp.float32),
        "g1": 1.0 + 0.1 * jax.random.normal(ks[2], (out_ch,), jnp.float32),
        "be1": 0.1 * jax.random.normal(ks[3], (out_ch,), jnp.float32),
        "w2": 0.1 * jax.random.normal(ks[4], (3, 3, out_ch, out_ch), jnp.float32),
        "b2": 0.1 * jax.random.normal(ks[5], (out_ch,), jnp.float32),
        "g2": 1.0 + 0.1 * jax.random.normal(ks[6], (out_ch,), jnp.float32),
        "be2": 0.1 * jax.random.normal(ks[7], (out_ch,), jnp.float32),
    }


if __name__ == "__main__":
    key = jax.random.PRNGKey(0)
    k_x1, k_x2, k_p = jax.random.split(key, 3)

    # up(in_ch=8, out_ch=8): x1 = 4 channels at half resolution, x2 = 4-channel skip.
    x1 = jax.random.normal(k_x1, (2, 4, 8, 8), jnp.float32)      # NCHW
    x2 = jax.random.normal(k_x2, (2, 4, 16, 16), jnp.float32)    # NCHW
    params = make_params(k_p, in_ch=8, out_ch=8)

    y = up_forward(x1, x2, params)
    y = jax.block_until_ready(y)
    assert y.shape == (2, 8, 16, 16) and y.dtype == jnp.float32

    ref = up_reference(x1, x2, params)
    err = float(jnp.max(jnp.abs(y - ref)))
    scale = float(jnp.max(jnp.abs(ref))) + 1e-6
    assert err <= 5e-2 * scale + 1e-4, f"kernel/reference mismatch: {err} (scale {scale})"

    print("KERNEL_OK")
</pallas_src>

<mosaic_0001>
module attributes {stable_mosaic.version = 11 : i64} {
  func.func @_upsample_w_kernel(%arg0: i32, %arg1: memref<18x8xf32, #tpu.memory_space<vmem>>, %arg2: memref<1x8x1024xf32, #tpu.memory_space<vmem>>, %arg3: memref<1x18x1024xf32, #tpu.memory_space<vmem>>) attributes {dimension_semantics = [#tpu.dimension_semantics<parallel>], iteration_bounds = array<i64: 2>, scalar_prefetch = 0 : i64, scratch_operands = 0 : i64, tpu.core_type = #tpu.core_type<tc>, window_params = [{pipeline_mode = #tpu.pipeline_mode<synchronous>, transform_indices = @transform_0, window_bounds = array<i64: 18, 8>}, {transform_indices = @transform_1, window_bounds = array<i64: 1, 8, 1024>}, {transform_indices = @transform_2, window_bounds = array<i64: 1, 18, 1024>}]} {
    %c0 = arith.constant 0 : index
    %c0_0 = arith.constant 0 : index
    %0 = vector.load %arg1[%c0, %c0_0] : memref<18x8xf32, #tpu.memory_space<vmem>>, vector<18x8xf32>
    %c0_1 = arith.constant 0 : index
    %c0_2 = arith.constant 0 : index
    %c0_3 = arith.constant 0 : index
    %1 = vector.load %arg2[%c0_1, %c0_2, %c0_3] : memref<1x8x1024xf32, #tpu.memory_space<vmem>>, vector<1x8x1024xf32>
    %2 = vector.shape_cast %1 : vector<1x8x1024xf32> to vector<8x1024xf32>
    %cst = arith.constant dense<0.000000e+00> : vector<18x1024xf32>
    %3 = tpu.matmul %0, %2, %cst {dimension_numbers = #tpu.dot_dimension_numbers<[1], [0], [0], [1], [0, 0, 1, 1], [], []>} : vector<18x8xf32>, vector<8x1024xf32>, vector<18x1024xf32> -> vector<18x1024xf32>
    %c0_4 = arith.constant 0 : index
    %c0_5 = arith.constant 0 : index
    %c0_6 = arith.constant 0 : index
    %4 = vector.load %arg3[%c0_4, %c0_5, %c0_6] : memref<1x18x1024xf32, #tpu.memory_space<vmem>>, vector<1x18x1024xf32>
    %5 = vector.shape_cast %4 : vector<1x18x1024xf32> to vector<18x1024xf32>
    %6 = vector.shape_cast %3 : vector<18x1024xf32> to vector<1x18x1024xf32>
    tpu.vector_store %arg3[%c0_4, %c0_5, %c0_6], %6 {strides = array<i32>} : memref<1x18x1024xf32, #tpu.memory_space<vmem>>, vector<1x18x1024xf32>,
    return
  }
  func.func @transform_0(%arg0: i32) -> (i32, i32) {
    %c0_i32 = arith.constant 0 : i32
    %c0_i32_0 = arith.constant 0 : i32
    %c0_i32_1 = arith.constant 0 : i32
    return %c0_i32, %c0_i32_0 : i32, i32
  }
  func.func @transform_1(%arg0: i32) -> (i32, i32, i32) {
    %c0_i32 = arith.constant 0 : i32
    %c0_i32_0 = arith.constant 0 : i32
    %c0_i32_1 = arith.constant 0 : i32
    return %arg0, %c0_i32, %c0_i32_0 : i32, i32, i32
  }
  func.func @transform_2(%arg0: i32) -> (i32, i32, i32) {
    %c0_i32 = arith.constant 0 : i32
    %c0_i32_0 = arith.constant 0 : i32
    %c0_i32_1 = arith.constant 0 : i32
    return %arg0, %c0_i32, %c0_i32_0 : i32, i32, i32
  }
}

</mosaic_0001>

<llo_original>
// kernel: tpu_custom_call.1
$region0: #{tpu_custom_call.1}
  #allocation0 [shape = 'u32[]', space=smem, size = 0x4, offset = 0x4, fixed_abs, tag = 'smem constant byte address 0x4 - core index']
  #allocation1 [shape = 'u32[72,128]{1,0:T(1,128)}', space=vmem, size = 0x9000, scoped, tag = 'internal scratch']
  %s0 = inlined_call_operand.vmem [shape: f32[18,8], index: 0, kind: input, shape index: {}]
  %s1 = inlined_call_operand.hbm [shape: f32[2,8,1024], index: 1, kind: input, shape index: {}]
  %s2 = inlined_call_operand.vmem [shape: f32[2,18,1024], index: 2, kind: output, shape index: {}]
  %s3 = sld [smem:[#allocation0]]
  $region45: #{tpu_custom_call.1} parent=0
    _
  %s5 = ssub.s32 1, %s3
  %s6 = scalar_select 0, %s5, %s3
  $region1: #{tpu_custom_call.1} parent=0
    #allocation2 [shape = 'u8[65536]{0}', space=vmem, size = 0x10000, scoped, tag = 'input window, operand 1']
    #allocation3 [shape = 's32[2]{0}', space=sflag, size = 0x8, scoped, tag = 'scoped memory for tpu_custom_call.1']
    %7 = vsyncpa [#allocation3], 0
    %s8 = scalar_lea.sflag [#allocation3], 1
    %9 = vsyncpa %s8, 0
    loop: start=0, step=1, limit=4
    $region2: #{tpu_custom_call.1} parent=1 // loop_pre_header
      _
    $region3: #{tpu_custom_call.1} parent=1 // loop_header
      %s11 = sphi 0, %s15
      %p12 = scmp.ge.s32.totalorder %s11, 4
      %s19 = sphi 0, %s19
      %s21 = sphi 0, %s19
      %s22 = sphi 0, %s21
      %s36 = sphi 0, %s22
      %s42 = sphi 0, %s44
      %s45 = sphi 0, %s42
      %s46 = sphi 0, %s45
      %s62 = sphi 0, %s46
      %s68 = sphi 0, %s70
      %s71 = sphi 0, %s68
      %s72 = sphi 0, %s71
      %s88 = sphi 0, %s72
    $region4: #{tpu_custom_call.1} parent=1 // loop_header_branch
      %14 = sbr.rel (%p12) target = $region8
    $region5: #{tpu_custom_call.1} parent=1 // loop_body
      %s16 = ssub.s32 %s11, 1
      %s17 = ssub.s32 %s11, 2
      %s18 = sadd.s32 %s11, 1
      %s20 = sadd.s32 %s19, 1
      %p23 = scmp.eq.s32.totalorder %s11, 1
      %p24 = scmp.ne.s32.totalorder %s19, %s21
      %p25 = scmp.eq.s32.totalorder %s11, 0
      %p26 = por %p24, %p25
      %p27 = scmp.ne.s32.totalorder %s19, %s21
      %p28 = scmp.eq.s32.totalorder %s16, 1
      %p29 = por %p27, %p28
      %p30 = scmp.ne.s32.totalorder %s21, %s22
      %p31 = scmp.eq.s32.totalorder %s16, 0
      %p32 = por %p30, %p31
      %p33 = scmp.ne.s32.totalorder %s21, %s22
      %p34 = scmp.eq.s32.totalorder %s17, 1
      %p35 = por %p33, %p34
      %p37 = scmp.ne.s32.totalorder %s22, %s36
      %p38 = scmp.eq.s32.totalorder %s17, 0
      %p39 = por %p37, %p38
      %s40 = ssub.s32 %s11, %s18
      %p41 = scmp.eq.s32.totalorder %s40, 0
      %s43 = sadd.s32 %s42, 1
      %s44 = scalar_select %p41, %s42, %s43
      %p47 = pneg %p41
      %p48 = scmp.eq.s32.totalorder %s11, 1
      %p49 = por %p47, %p48
      %p50 = scmp.ne.s32.totalorder %s42, %s45
      %p51 = scmp.eq.s32.totalorder %s11, 0
      %p52 = por %p50, %p51
      %p53 = scmp.ne.s32.totalorder %s42, %s45
      %p54 = scmp.eq.s32.totalorder %s16, 1
      %p55 = por %p53, %p54
      %p56 = scmp.ne.s32.totalorder %s45, %s46
      %p57 = scmp.eq.s32.totalorder %s16, 0
      %p58 = por %p56, %p57
      %p59 = scmp.ne.s32.totalorder %s45, %s46
      %p60 = scmp.eq.s32.totalorder %s17, 1
      %p61 = por %p59, %p60
      %p63 = scmp.ne.s32.totalorder %s46, %s62
      %p64 = scmp.eq.s32.totalorder %s17, 0
      %p65 = por %p63, %p64
      %s66 = ssub.s32 %s11, %s18
      %p67 = scmp.eq.s32.totalorder %s66, 0
      %s69 = sadd.s32 %s68, 1
      %s70 = scalar_select %p67, %s68, %s69
      %p73 = pneg %p67
      %p74 = scmp.eq.s32.totalorder %s11, 1
      %p75 = por %p73, %p74
      %p76 = scmp.ne.s32.totalorder %s68, %s71
      %p77 = scmp.eq.s32.totalorder %s11, 0
      %p78 = por %p76, %p77
      %p79 = scmp.ne.s32.totalorder %s68, %s71
      %p80 = scmp.eq.s32.totalorder %s16, 1
      %p81 = por %p79, %p80
      %p82 = scmp.ne.s32.totalorder %s71, %s72
      %p83 = scmp.eq.s32.totalorder %s16, 0
      %p84 = por %p82, %p83
      %p85 = scmp.ne.s32.totalorder %s71, %s72
      %p86 = scmp.eq.s32.totalorder %s17, 1
      %p87 = por %p85, %p86
      %p89 = scmp.ne.s32.totalorder %s72, %s88
      %p90 = scmp.eq.s32.totalorder %s17, 0
      %p91 = por %p89, %p90
      %p92 = scmp.le.s32.totalorder 1, %s11
      %p93 = scmp.lt.s32.totalorder %s11, 3
      %p94 = pnand %p92, %p93
      %p95 = pneg %p94
      // Predicated region
      $region9: #{tpu_custom_call.1} parent=5 // pred_check
        _
      $region10: #{tpu_custom_call.1} parent=5 // pred_check_branch
        %97 = sbr.rel (%p94) target = $region12
      $region11: #{tpu_custom_call.1} parent=5 // pred_region
        %s98 = ssub.s32 %s11, 1
        // Predicated region
        $region13: #{tpu_custom_call.1} parent=11 // pred_check
          %p99 = pneg %p32
        $region14: #{tpu_custom_call.1} parent=11 // pred_check_branch
          %101 = sbr.rel (%p99) target = $region16
        $region15: #{tpu_custom_call.1} parent=11 // pred_region
          _
        $region16: #{tpu_custom_call.1} parent=11 // pred_fallthru
          _
      $region12: #{tpu_custom_call.1} parent=5 // pred_fallthru
        _
      %p102 = scmp.lt.s32.totalorder %s11, 2
      // Predicated region
      $region17: #{tpu_custom_call.1} parent=5 // pred_check
        %p103 = pneg %p102
      $region18: #{tpu_custom_call.1} parent=5 // pred_check_branch
        %105 = sbr.rel (%p103) target = $region20
      $region19: #{tpu_custom_call.1} parent=5 // pred_region
        // Predicated region
        $region21: #{tpu_custom_call.1} parent=19 // pred_check
          %p106 = pneg %p52
        $region22: #{tpu_custom_call.1} parent=19 // pred_check_branch
          %108 = sbr.rel (%p106) target = $region24
        $region23: #{tpu_custom_call.1} parent=19 // pred_region
          %s109 = sand.u32 %s42, 1
          %s110 = scalar_lea.sflag [#allocation3], %s109
          %s111 = sand.u32 %s42, 1
          %s112 = smul.addr %s111, 64
          %s113 = scalar_lea.vmem [#allocation2], %s112
          %115 = vsyncadd %s110, 0
          %s116 = smul.addr %s11, 8
          %s117 = smul.addr %s116, 8
          %s118 = scalar_lea.hbm %s1, %s117
          %s120 = sshll.u32 %s118, 4
          %s121 = int_to_ptr.hbm [resolvable:$true] %s120
          %s122 = sshll.u32 %s113, 4
          %s123 = int_to_ptr.vmem [resolvable:$true] %s122
          %125 = dma.hbm_to_vmem [thread:$0]  %s121, 1024, %s123, %s110
        $region24: #{tpu_custom_call.1} parent=19 // pred_fallthru
          _
      $region20: #{tpu_custom_call.1} parent=5 // pred_fallthru
        _
      %p126 = scmp.le.s32.totalorder 1, %s11
      %p127 = scmp.lt.s32.totalorder %s11, 3
      %p128 = pnand %p126, %p127
      %p129 = pneg %p128
      // Predicated region
      $region25: #{tpu_custom_call.1} parent=5 // pred_check
        _
      $region26: #{tpu_custom_call.1} parent=5 // pred_check_branch
        %131 = sbr.rel (%p128) target = $region28
      $region27: #{tpu_custom_call.1} parent=5 // pred_region
        %s132 = ssub.s32 %s11, 1
        %s133 = sand.u32 %s45, 1
        %s134 = scalar_lea.sflag [#allocation3], %s133
        %s135 = sand.u32 %s45, 1
        %s136 = smul.addr %s135, 64
        %s137 = scalar_lea.vmem [#allocation2], %s136
        // Predicated region
        $region29: #{tpu_custom_call.1} parent=27 // pred_check
          %p138 = pneg %p58
        $region30: #{tpu_custom_call.1} parent=27 // pred_check_branch
          %140 = sbr.rel (%p138) target = $region32
        $region31: #{tpu_custom_call.1} parent=27 // pred_region
          %142 = dma.done %s134, 1024
        $region32: #{tpu_custom_call.1} parent=27 // pred_fallthru
          _
        %p143 = pneg %p32
        %p144 = pneg %p29
        %s145 = sand.u32 %s45, 1
        %s146 = scalar_lea.sflag [#allocation3], %s145
        %s147 = sand.u32 %s45, 1
        %s148 = smul.addr %s147, 64
        %s149 = scalar_lea.vmem [#allocation2], %s148
        %p150 = pneg %p58
        %p151 = pneg %p55
        %p152 = pneg %p84
        %p153 = pneg %p81
        %p154 = scmp.lt.s32.totalorder %s16, 1
        %s155 = scalar_select %p154, %s16, 1
        %s156 = smul.addr %s155, 24
        %s157 = smul.addr %s156, 8
        %s158 = scalar_lea.vmem %s2, %s157
        %p159 = scmp.lt.s32.totalorder %s16, 1
        %s160 = scalar_select %p159, %s16, 1
        %s161 = smul.addr %s160, 24
        %s162 = smul.addr %s161, 8
        %s163 = scalar_lea.vmem %s2, %s162
        %v164 = vld [vmem:[%s0] sm:$0xff]
        %v165 = vld [vmem:[%s0 + $0x8] sm:$0xff]
        %v166 = vld [vmem:[%s0 + $0x10] sm:$0x3]
        %v167 = vld [vmem:[%s137] sm:$0xff]
        %v168 = vld [vmem:[%s137 + $0x8] sm:$0xff]
        %v169 = vld [vmem:[%s137 + $0x10] sm:$0xff]
        %v170 = vld [vmem:[%s137 + $0x18] sm:$0xff]
        %v171 = vld [vmem:[%s137 + $0x20] sm:$0xff]
        %v172 = vld [vmem:[%s137 + $0x28] sm:$0xff]
        %v173 = vld [vmem:[%s137 + $0x30] sm:$0xff]
        %v174 = vld [vmem:[%s137 + $0x38] sm:$0xff]
        %vm175 = vcmask 64512
        %v177 = vsel %vm175, %v164, 0
        %v180 = vsel %vm175, %v165, 0
        %v183 = vsel %vm175, %v166, 0
        %185 = vmatpush.msra.mxu0 0.0
        %186 = vmatpush.msra.mxu0 0.0
        %187 = vmatpush.msra.mxu0 0.0
        %188 = vmatpush.msra.mxu0 0.0
        %189 = vmatpush.msra.mxu0 0.0
        %190 = vmatpush.msra.mxu0 0.0
        %191 = vmatpush.msra.mxu0 0.0
        %192 = vmatpush.msra.mxu0 0.0
        %193 = vmatpush.msra.mxu0 0.0
        %194 = vmatpush.msra.mxu0 0.0
        %195 = vmatpush.msra.mxu0 0.0
        %196 = vmatpush.msra.mxu0 0.0
        %197 = vmatpush.msra.mxu0 0.0
        %198 = vmatpush.msra.mxu0 0.0
        %199 = vmatpush.msra.mxu0 0.0
        %200 = vmatpush.msra.mxu0 %v167
        %201 = vmatmul.f32.gmra.mxu0 %v177
        %v202 = vpop.f32.mrf.mxu0
        %v203 = vadd.f32 0.0, %v202
        %204 = vmatmul.f32.gmra.mxu0 %v180
        %v205 = vpop.f32.mrf.mxu0
        %v206 = vadd.f32 0.0, %v205
        %207 = vmatmul.f32.gmra.mxu0 %v183
        %v208 = vpop.f32.mrf.mxu0
        %v209 = vadd.f32 0.0, %v208
        %210 = vdwg.mxu0
        %211 = vmatpush.msra.mxu0 0.0
        %212 = vmatpush.msra.mxu0 0.0
        %213 = vmatpush.msra.mxu0 0.0
        %214 = vmatpush.msra.mxu0 0.0
        %215 = vmatpush.msra.mxu0 0.0
        %216 = vmatpush.msra.mxu0 0.0
        %217 = vmatpush.msra.mxu0 0.0
        %218 = vmatpush.msra.mxu0 0.0
        %219 = vmatpush.msra.mxu0 0.0
        %220 = vmatpush.msra.mxu0 0.0
        %221 = vmatpush.msra.mxu0 0.0
        %222 = vmatpush.msra.mxu0 0.0
        %223 = vmatpush.msra.mxu0 0.0
        %224 = vmatpush.msra.mxu0 0.0
        %225 = vmatpush.msra.mxu0 0.0
        %226 = vmatpush.msra.mxu0 %v168
        %227 = vmatmul.f32.gmra.mxu0 %v177
        %v228 = vpop.f32.mrf.mxu0
        %v229 = vadd.f32 0.0, %v228
        %230 = vmatmul.f32.gmra.mxu0 %v180
        %v231 = vpop.f32.mrf.mxu0
        %v232 = vadd.f32 0.0, %v231
        %233 = vmatmul.f32.gmra.mxu0 %v183
        %v234 = vpop.f32.mrf.mxu0
        %v235 = vadd.f32 0.0, %v234
        %236 = vdwg.mxu0
        %237 = vmatpush.msra.mxu0 0.0
        %238 = vmatpush.msra.mxu0 0.0
        %239 = vmatpush.msra.mxu0 0.0
        %240 = vmatpush.msra.mxu0 0.0
        %241 = vmatpush.msra.mxu0 0.0
        %242 = vmatpush.msra.mxu0 0.0
        %243 = vmatpush.msra.mxu0 0.0
        %244 = vmatpush.msra.mxu0 0.0
        %245 = vmatpush.msra.mxu0 0.0
        %246 = vmatpush.msra.mxu0 0.0
        %247 = vmatpush.msra.mxu0 0.0
        %248 = vmatpush.msra.mxu0 0.0
        %249 = vmatpush.msra.mxu0 0.0
        %250 = vmatpush.msra.mxu0 0.0
        %251 = vmatpush.msra.mxu0 0.0
        %252 = vmatpush.msra.mxu0 %v169
        %253 = vmatmul.f32.gmra.mxu0 %v177
        %v254 = vpop.f32.mrf.mxu0
        %v255 = vadd.f32 0.0, %v254
        %256 = vmatmul.f32.gmra.mxu0 %v180
        %v257 = vpop.f32.mrf.mxu0
        %v258 = vadd.f32 0.0, %v257
        %259 = vmatmul.f32.gmra.mxu0 %v183
        %v260 = vpop.f32.mrf.mxu0
        %v261 = vadd.f32 0.0, %v260
        %262 = vdwg.mxu0
        %263 = vmatpush.msra.mxu0 0.0
        %264 = vmatpush.msra.mxu0 0.0
        %265 = vmatpush.msra.mxu0 0.0
        %266 = vmatpush.msra.mxu0 0.0
        %267 = vmatpush.msra.mxu0 0.0
        %268 = vmatpush.msra.mxu0 0.0
        %269 = vmatpush.msra.mxu0 0.0
        %270 = vmatpush.msra.mxu0 0.0
        %271 = vmatpush.msra.mxu0 0.0
        %272 = vmatpush.msra.mxu0 0.0
        %273 = vmatpush.msra.mxu0 0.0
        %274 = vmatpush.msra.mxu0 0.0
        %275 = vmatpush.msra.mxu0 0.0
        %276 = vmatpush.msra.mxu0 0.0
        %277 = vmatpush.msra.mxu0 0.0
        %278 = vmatpush.msra.mxu0 %v170
        %279 = vmatmul.f32.gmra.mxu0 %v177
        %v280 = vpop.f32.mrf.mxu0
        %v281 = vadd.f32 0.0, %v280
        %282 = vmatmul.f32.gmra.mxu0 %v180
        %v283 = vpop.f32.mrf.mxu0
        %v284 = vadd.f32 0.0, %v283
        %285 = vmatmul.f32.gmra.mxu0 %v183
        %v286 = vpop.f32.mrf.mxu0
        %v287 = vadd.f32 0.0, %v286
        %288 = vdwg.mxu0
        %289 = vmatpush.msra.mxu0 0.0
        %290 = vmatpush.msra.mxu0 0.0
        %291 = vmatpush.msra.mxu0 0.0
        %292 = vmatpush.msra.mxu0 0.0
        %293 = vmatpush.msra.mxu0 0.0
        %294 = vmatpush.msra.mxu0 0.0
        %295 = vmatpush.msra.mxu0 0.0
        %296 = vmatpush.msra.mxu0 0.0
        %297 = vmatpush.msra.mxu0 0.0
        %298 = vmatpush.msra.mxu0 0.0
        %299 = vmatpush.msra.mxu0 0.0
        %300 = vmatpush.msra.mxu0 0.0
        %301 = vmatpush.msra.mxu0 0.0
        %302 = vmatpush.msra.mxu0 0.0
        %303 = vmatpush.msra.mxu0 0.0
        %304 = vmatpush.msra.mxu0 %v171
        %305 = vmatmul.f32.gmra.mxu0 %v177
        %v306 = vpop.f32.mrf.mxu0
        %v307 = vadd.f32 0.0, %v306
        %308 = vmatmul.f32.gmra.mxu0 %v180
        %v309 = vpop.f32.mrf.mxu0
        %v310 = vadd.f32 0.0, %v309
        %311 = vmatmul.f32.gmra.mxu0 %v183
        %v312 = vpop.f32.mrf.mxu0
        %v313 = vadd.f32 0.0, %v312
        %314 = vdwg.mxu0
        %315 = vmatpush.msra.mxu0 0.0
        %316 = vmatpush.msra.mxu0 0.0
        %317 = vmatpush.msra.mxu0 0.0
        %318 = vmatpush.msra.mxu0 0.0
        %319 = vmatpush.msra.mxu0 0.0
        %320 = vmatpush.msra.mxu0 0.0
        %321 = vmatpush.msra.mxu0 0.0
        %322 = vmatpush.msra.mxu0 0.0
        %323 = vmatpush.msra.mxu0 0.0
        %324 = vmatpush.msra.mxu0 0.0
        %325 = vmatpush.msra.mxu0 0.0
        %326 = vmatpush.msra.mxu0 0.0
        %327 = vmatpush.msra.mxu0 0.0
        %328 = vmatpush.msra.mxu0 0.0
        %329 = vmatpush.msra.mxu0 0.0
        %330 = vmatpush.msra.mxu0 %v172
        %331 = vmatmul.f32.gmra.mxu0 %v177
        %v332 = vpop.f32.mrf.mxu0
        %v333 = vadd.f32 0.0, %v332
        %334 = vmatmul.f32.gmra.mxu0 %v180
        %v335 = vpop.f32.mrf.mxu0
        %v336 = vadd.f32 0.0, %v335
        %337 = vmatmul.f32.gmra.mxu0 %v183
        %v338 = vpop.f32.mrf.mxu0
        %v339 = vadd.f32 0.0, %v338
        %340 = vdwg.mxu0
        %341 = vmatpush.msra.mxu0 0.0
        %342 = vmatpush.msra.mxu0 0.0
        %343 = vmatpush.msra.mxu0 0.0
        %344 = vmatpush.msra.mxu0 0.0
        %345 = vmatpush.msra.mxu0 0.0
        %346 = vmatpush.msra.mxu0 0.0
        %347 = vmatpush.msra.mxu0 0.0
        %348 = vmatpush.msra.mxu0 0.0
        %349 = vmatpush.msra.mxu0 0.0
        %350 = vmatpush.msra.mxu0 0.0
        %351 = vmatpush.msra.mxu0 0.0
        %352 = vmatpush.msra.mxu0 0.0
        %353 = vmatpush.msra.mxu0 0.0
        %354 = vmatpush.msra.mxu0 0.0
        %355 = vmatpush.msra.mxu0 0.0
        %356 = vmatpush.msra.mxu0 %v173
        %357 = vmatmul.f32.gmra.mxu0 %v177
        %v358 = vpop.f32.mrf.mxu0
        %v359 = vadd.f32 0.0, %v358
        %360 = vmatmul.f32.gmra.mxu0 %v180
        %v361 = vpop.f32.mrf.mxu0
        %v362 = vadd.f32 0.0, %v361
        %363 = vmatmul.f32.gmra.mxu0 %v183
        %v364 = vpop.f32.mrf.mxu0
        %v365 = vadd.f32 0.0, %v364
        %366 = vdwg.mxu0
        %367 = vmatpush.msra.mxu0 0.0
        %368 = vmatpush.msra.mxu0 0.0
        %369 = vmatpush.msra.mxu0 0.0
        %370 = vmatpush.msra.mxu0 0.0
        %371 = vmatpush.msra.mxu0 0.0
        %372 = vmatpush.msra.mxu0 0.0
        %373 = vmatpush.msra.mxu0 0.0
        %374 = vmatpush.msra.mxu0 0.0
        %375 = vmatpush.msra.mxu0 0.0
        %376 = vmatpush.msra.mxu0 0.0
        %377 = vmatpush.msra.mxu0 0.0
        %378 = vmatpush.msra.mxu0 0.0
        %379 = vmatpush.msra.mxu0 0.0
        %380 = vmatpush.msra.mxu0 0.0
        %381 = vmatpush.msra.mxu0 0.0
        %382 = vmatpush.msra.mxu0 %v174
        %383 = vmatmul.f32.gmra.mxu0 %v177
        %v384 = vpop.f32.mrf.mxu0
        %v385 = vadd.f32 0.0, %v384
        %386 = vmatmul.f32.gmra.mxu0 %v180
        %v387 = vpop.f32.mrf.mxu0
        %v388 = vadd.f32 0.0, %v387
        %389 = vmatmul.f32.gmra.mxu0 %v183
        %v390 = vpop.f32.mrf.mxu0
        %v391 = vadd.f32 0.0, %v390
        %392 = vdwg.mxu0
        %393 = vst [vmem:[%s163] sm:$0xff] %v203
        %394 = vst [vmem:[%s163 + $0x8] sm:$0xff] %v229
        %395 = vst [vmem:[%s163 + $0x10] sm:$0xff] %v255
        %396 = vst [vmem:[%s163 + $0x18] sm:$0xff] %v281
        %397 = vst [vmem:[%s163 + $0x20] sm:$0xff] %v307
        %398 = vst [vmem:[%s163 + $0x28] sm:$0xff] %v333
        %399 = vst [vmem:[%s163 + $0x30] sm:$0xff] %v359
        %400 = vst [vmem:[%s163 + $0x38] sm:$0xff] %v385
        %401 = vst [vmem:[%s163 + $0x40] sm:$0xff] %v206
        %402 = vst [vmem:[%s163 + $0x48] sm:$0xff] %v232
        %403 = vst [vmem:[%s163 + $0x50] sm:$0xff] %v258
        %404 = vst [vmem:[%s163 + $0x58] sm:$0xff] %v284
        %405 = vst [vmem:[%s163 + $0x60] sm:$0xff] %v310
        %406 = vst [vmem:[%s163 + $0x68] sm:$0xff] %v336
        %407 = vst [vmem:[%s163 + $0x70] sm:$0xff] %v362
        %408 = vst [vmem:[%s163 + $0x78] sm:$0xff] %v388
        %409 = vst [vmem:[%s163 + $0x80] sm:$0x3] %v209
        %410 = vst [vmem:[%s163 + $0x88] sm:$0x3] %v235
        %411 = vst [vmem:[%s163 + $0x90] sm:$0x3] %v261
        %412 = vst [vmem:[%s163 + $0x98] sm:$0x3] %v287
        %413 = vst [vmem:[%s163 + $0xa0] sm:$0x3] %v313
        %414 = vst [vmem:[%s163 + $0xa8] sm:$0x3] %v339
        %415 = vst [vmem:[%s163 + $0xb0] sm:$0x3] %v365
        %416 = vst [vmem:[%s163 + $0xb8] sm:$0x3] %v391
        %p417 = scmp.lt.s32.totalorder %s16, 1
        %s418 = scalar_select %p417, %s16, 1
        %s419 = smul.addr %s418, 24
        %s420 = smul.addr %s419, 8
        %s421 = scalar_lea.vmem %s2, %s420
        // Predicated region
        $region33: #{tpu_custom_call.1} parent=27 // pred_check
          %p422 = pneg %p81
        $region34: #{tpu_custom_call.1} parent=27 // pred_check_branch
          %424 = sbr.rel (%p422) target = $region36
        $region35: #{tpu_custom_call.1} parent=27 // pred_region
          _
        $region36: #{tpu_custom_call.1} parent=27 // pred_fallthru
          _
      $region28: #{tpu_custom_call.1} parent=5 // pred_fallthru
        _
      %p425 = scmp.le.s32.totalorder 2, %s11
      // Predicated region
      $region37: #{tpu_custom_call.1} parent=5 // pred_check
        %p426 = pneg %p425
      $region38: #{tpu_custom_call.1} parent=5 // pred_check_branch
        %428 = sbr.rel (%p426) target = $region40
      $region39: #{tpu_custom_call.1} parent=5 // pred_region
        %s429 = ssub.s32 %s11, 2
        // Predicated region
        $region41: #{tpu_custom_call.1} parent=39 // pred_check
          %p430 = pneg %p87
        $region42: #{tpu_custom_call.1} parent=39 // pred_check_branch
          %432 = sbr.rel (%p430) target = $region44
        $region43: #{tpu_custom_call.1} parent=39 // pred_region
          %p433 = scmp.lt.s32.totalorder %s17, 1
          %s434 = scalar_select %p433, %s17, 1
          %s435 = smul.addr %s434, 24
          %s436 = smul.addr %s435, 8
          %s437 = scalar_lea.vmem %s2, %s436
        $region44: #{tpu_custom_call.1} parent=39 // pred_fallthru
          _
      $region40: #{tpu_custom_call.1} parent=5 // pred_fallthru
        _
    $region6: #{tpu_custom_call.1} parent=1 // loop_footer
      %s15 = sadd.s32 1, %s11
    $region7: #{tpu_custom_call.1} parent=1 // loop_footer_branch
      %10 = sbr.rel target = $region3
    $region8: #{tpu_custom_call.1} parent=1 // loop_exit
      _
    %438 = vsyncpa [#allocation3], 1
    %s439 = scalar_lea.sflag [#allocation3], 1
    %440 = vsyncpa %s439, 1

</llo_original>
